<compile_context>
chip_gen: v5e
topology: v5e:2x2
jax: 0.10.0
libtpu: 0.0.40
codegen_flags: <defaults>
</compile_context>

<pallas_src>
import math

import jax
import jax.numpy as jnp
from jax.experimental import pallas as pl
from jax.experimental.pallas import tpu as pltpu

PRIOR_SCALE = 6.0  # torch.distributions.Normal(0, 6): 6 is the scale
HALF_LOG_2PI = 0.5 * math.log(2.0 * math.pi)
LOG_PRIOR_SCALE = math.log(PRIOR_SCALE)
INV_TWO_PRIOR_VAR = 1.0 / (2.0 * PRIOR_SCALE * PRIOR_SCALE)


def _stable_softplus(x):
    # log(1 + exp(x)) without overflow for large x. (log1p would be marginally more
    # accurate; log(1+.) kept for guaranteed Mosaic lowering — same EUP op count.)
    return jnp.maximum(x, 0.0) + jnp.log(1.0 + jnp.exp(-jnp.abs(x)))


def classifier_bbb_kernel(
        x_ref,
        w1_mu_ref, w1_rho_ref, w1_eps_ref, b1_mu_ref, b1_rho_ref, b1_eps_ref,
        w2_mu_ref, w2_rho_ref, w2_eps_ref, b2_mu_ref, b2_rho_ref, b2_eps_ref,
        w3_mu_ref, w3_rho_ref, w3_eps_ref, b3_mu_ref, b3_rho_ref, b3_eps_ref,
        out_ref, log_prior_ref, log_post_ref):

    def bbb_layer(h, w_mu_ref, w_rho_ref, w_eps_ref, b_mu_ref, b_rho_ref, b_eps_ref):
        # ---- reparameterized sampling (w/b stay resident in vregs/VMEM) ----
        w_rho = w_rho_ref[...]
        w_sigma = _stable_softplus(w_rho)
        w_eps = w_eps_ref[...]
        w = w_mu_ref[...] + w_sigma * w_eps                 # (in_f, out_f)

        b_rho = b_rho_ref[...]
        b_sigma = _stable_softplus(b_rho)
        b_eps = b_eps_ref[...]
        b = b_mu_ref[...] + b_sigma * b_eps                 # (1, out_f)

        n_total = w_mu_ref.shape[0] * w_mu_ref.shape[1] + b_mu_ref.shape[1]

        # log_prior = sum Normal(0, 6).log_prob(theta)
        #           = -sum(theta^2)/(2*36) - N*(log 6 + 0.5*log 2pi)
        sq_sum = jnp.sum(w * w) + jnp.sum(b * b)
        lp = -sq_sum * INV_TWO_PRIOR_VAR - n_total * (LOG_PRIOR_SCALE + HALF_LOG_2PI)

        # log_post = sum Normal(mu, sigma).log_prob(theta); theta - mu = sigma*eps
        #          = sum(-0.5*eps^2 - log sigma) - N*0.5*log 2pi
        # Guard: softplus(rho) ~= exp(rho) for rho << 0, so log(sigma) ~= rho there.
        log_w_sigma = jnp.where(w_rho < -20.0, w_rho, jnp.log(w_sigma))
        log_b_sigma = jnp.where(b_rho < -20.0, b_rho, jnp.log(b_sigma))
        lq = (jnp.sum(-0.5 * (w_eps * w_eps) - log_w_sigma)
              + jnp.sum(-0.5 * (b_eps * b_eps) - log_b_sigma)
              - n_total * HALF_LOG_2PI)

        # ---- F.linear: canonical (M,K)x(K,N) contraction, no weight transpose ----
        y = jax.lax.dot_general(
            h, w, dimension_numbers=(((1,), (0,)), ((), ())),
            preferred_element_type=jnp.float32) + b
        return y, lp, lq

    h = x_ref[...]

    h, lp1, lq1 = bbb_layer(h, w1_mu_ref, w1_rho_ref, w1_eps_ref,
                            b1_mu_ref, b1_rho_ref, b1_eps_ref)
    h = 1.0 / (1.0 + jnp.exp(-h))   # sigmoid (exact; approx vrcp would trade ~1e-4 error)

    h, lp2, lq2 = bbb_layer(h, w2_mu_ref, w2_rho_ref, w2_eps_ref,
                            b2_mu_ref, b2_rho_ref, b2_eps_ref)
    h = 1.0 / (1.0 + jnp.exp(-h))

    logits, lp3, lq3 = bbb_layer(h, w3_mu_ref, w3_rho_ref, w3_eps_ref,
                                 b3_mu_ref, b3_rho_ref, b3_eps_ref)
    m = jnp.max(logits, axis=-1, keepdims=True)
    s = logits - m
    out = s - jnp.log(jnp.sum(jnp.exp(s), axis=-1, keepdims=True))

    out_ref[...] = out.astype(out_ref.dtype)
    log_prior_ref[0] = lp1 + lp2 + lp3
    log_post_ref[0] = lq1 + lq2 + lq3


def sample_epsilons(key, params):
    """Per-layer (w_eps, b_eps) standard-normal tensors in the kernel's (in_f, out_f) layout."""
    # TODO(synk): move eps generation on-chip (pltpu.prng_seed + pltpu.prng_random_bits)
    # to drop a weight-sized HBM write+read per layer; that changes the random stream
    # vs this jax.random-based reference, so the exact-match test would need to change.
    eps = []
    for (w_mu, _w_rho, b_mu, _b_rho), k in zip(params, jax.random.split(key, len(params))):
        kw, kb = jax.random.split(k)
        eps.append((jax.random.normal(kw, w_mu.shape, dtype=jnp.float32),
                    jax.random.normal(kb, (1, b_mu.shape[0]), dtype=jnp.float32)))
    return tuple(eps)


def classifier_bbb_pallas(x, params, eps):
    """Fused forward. Returns (log_probs, total_log_prior, total_log_post)."""
    batch = x.shape[0]
    out_dim = params[-1][0].shape[1]

    flat_inputs = [x]
    for (w_mu, w_rho, b_mu, b_rho), (w_eps, b_eps) in zip(params, eps):
        out_f = w_mu.shape[1]
        flat_inputs += [w_mu, w_rho, w_eps,
                        b_mu.reshape(1, out_f), b_rho.reshape(1, out_f), b_eps]

    out, log_prior, log_post = pl.pallas_call(
        classifier_bbb_kernel,
        out_shape=(
            jax.ShapeDtypeStruct((batch, out_dim), jnp.float32),
            jax.ShapeDtypeStruct((1,), jnp.float32),
            jax.ShapeDtypeStruct((1,), jnp.float32),
        ),
        in_specs=[pl.BlockSpec(memory_space=pltpu.VMEM)] * len(flat_inputs),
        out_specs=(
            pl.BlockSpec(memory_space=pltpu.VMEM),
            pl.BlockSpec(memory_space=pltpu.SMEM),
            pl.BlockSpec(memory_space=pltpu.SMEM),
        ),
    )(*flat_inputs)

    return out, log_prior[0], log_post[0]


def classifier_bbb_forward(x, params, key):
    """Classifier_BBB.forward semantics: sigmoid(h1) -> sigmoid(h2) -> log_softmax(out)."""
    return classifier_bbb_pallas(x, params, sample_epsilons(key, params))


# ----------------------------- pure-JAX reference -----------------------------
def _ref_normal_log_prob(x, mu, sigma):
    return -((x - mu) ** 2) / (2.0 * sigma * sigma) - jnp.log(sigma) - HALF_LOG_2PI


def classifier_bbb_reference(x, params, eps):
    activations = ("sigmoid", "sigmoid", "log_softmax")
    log_prior = jnp.float32(0.0)
    log_post = jnp.float32(0.0)
    h = x
    for (w_mu, w_rho, b_mu, b_rho), (w_eps, b_eps), act in zip(params, eps, activations):
        out_f = w_mu.shape[1]
        b_mu2 = b_mu.reshape(1, out_f)
        b_rho2 = b_rho.reshape(1, out_f)
        w_sigma = jnp.log(1.0 + jnp.exp(w_rho))
        b_sigma = jnp.log(1.0 + jnp.exp(b_rho2))
        w = w_mu + w_sigma * w_eps
        b = b_mu2 + b_sigma * b_eps
        log_prior = log_prior + (jnp.sum(_ref_normal_log_prob(w, 0.0, PRIOR_SCALE))
                                 + jnp.sum(_ref_normal_log_prob(b, 0.0, PRIOR_SCALE)))
        log_post = log_post + (jnp.sum(_ref_normal_log_prob(w, w_mu, w_sigma))
                               + jnp.sum(_ref_normal_log_prob(b, b_mu2, b_sigma)))
        y = h @ w + b
        if act == "sigmoid":
            h = 1.0 / (1.0 + jnp.exp(-y))
        else:
            m = jnp.max(y, axis=-1, keepdims=True)
            s = y - m
            h = s - jnp.log(jnp.sum(jnp.exp(s), axis=-1, keepdims=True))
    return h, log_prior, log_post


def _init_layer(key, in_f, out_f):
    # Mirrors the PyTorch __init__ (mu ~ U(-0.6, 0.6), rho == -6), but weights are
    # stored pre-transposed as (in_f, out_f) so the kernel matmul is the canonical
    # (M,K)x(K,N) form — no MXU-side transpose/relayout of the sampled w.
    k_w, k_b = jax.random.split(key)
    w_mu = jax.random.uniform(k_w, (in_f, out_f), minval=-0.6, maxval=0.6, dtype=jnp.float32)
    w_rho = jnp.full((in_f, out_f), -6.0, dtype=jnp.float32)
    b_mu = jax.random.uniform(k_b, (out_f,), minval=-0.6, maxval=0.6, dtype=jnp.float32)
    b_rho = jnp.full((out_f,), -6.0, dtype=jnp.float32)
    return (w_mu, w_rho, b_mu, b_rho)


if __name__ == "__main__":
    in_dim, hidden_dim, out_dim = 32, 32, 16
    batch = 8

    key = jax.random.PRNGKey(0)
    k_p1, k_p2, k_p3, k_x, k_fwd = jax.random.split(key, 5)

    params = (
        _init_layer(k_p1, in_dim, hidden_dim),
        _init_layer(k_p2, hidden_dim, hidden_dim),
        _init_layer(k_p3, hidden_dim, out_dim),
    )
    x = jax.random.normal(k_x, (batch, in_dim), dtype=jnp.float32)
    eps = sample_epsilons(k_fwd, params)

    out, log_prior, log_post = classifier_bbb_pallas(x, params, eps)
    jax.block_until_ready((out, log_prior, log_post))

    out_ref, lp_ref, lq_ref = classifier_bbb_reference(x, params, eps)

    assert out.shape == (batch, out_dim)
    assert jnp.allclose(out, out_ref, atol=2e-4, rtol=1e-4), "output mismatch"
    assert jnp.allclose(log_prior, lp_ref, atol=1e-2, rtol=1e-4), "log_prior mismatch"
    assert jnp.allclose(log_post, lq_ref, atol=5e-2, rtol=2e-4), "log_post mismatch"
    # log_softmax rows must (approximately) normalize
    assert jnp.allclose(jnp.sum(jnp.exp(out), axis=-1), 1.0, atol=1e-4)

    print("KERNEL_OK")
</pallas_src>

<mosaic_0001>
module attributes {stable_mosaic.version = 11 : i64} {
  func.func @classifier_bbb_kernel(%arg0: memref<8x32xf32, #tpu.memory_space<vmem>>, %arg1: memref<32x32xf32, #tpu.memory_space<vmem>>, %arg2: memref<32x32xf32, #tpu.memory_space<vmem>>, %arg3: memref<32x32xf32, #tpu.memory_space<vmem>>, %arg4: memref<1x32xf32, #tpu.memory_space<vmem>>, %arg5: memref<1x32xf32, #tpu.memory_space<vmem>>, %arg6: memref<1x32xf32, #tpu.memory_space<vmem>>, %arg7: memref<32x32xf32, #tpu.memory_space<vmem>>, %arg8: memref<32x32xf32, #tpu.memory_space<vmem>>, %arg9: memref<32x32xf32, #tpu.memory_space<vmem>>, %arg10: memref<1x32xf32, #tpu.memory_space<vmem>>, %arg11: memref<1x32xf32, #tpu.memory_space<vmem>>, %arg12: memref<1x32xf32, #tpu.memory_space<vmem>>, %arg13: memref<32x16xf32, #tpu.memory_space<vmem>>, %arg14: memref<32x16xf32, #tpu.memory_space<vmem>>, %arg15: memref<32x16xf32, #tpu.memory_space<vmem>>, %arg16: memref<1x16xf32, #tpu.memory_space<vmem>>, %arg17: memref<1x16xf32, #tpu.memory_space<vmem>>, %arg18: memref<1x16xf32, #tpu.memory_space<vmem>>, %arg19: memref<8x16xf32, #tpu.memory_space<vmem>>, %arg20: memref<1xf32, #tpu.memory_space<smem>>, %arg21: memref<1xf32, #tpu.memory_space<smem>>) attributes {dimension_semantics = [], scalar_prefetch = 0 : i64, scratch_operands = 0 : i64, tpu.core_type = #tpu.core_type<tc>} {
    %c0 = arith.constant 0 : index
    %c0_0 = arith.constant 0 : index
    %0 = vector.load %arg0[%c0, %c0_0] : memref<8x32xf32, #tpu.memory_space<vmem>>, vector<8x32xf32>
    %c0_1 = arith.constant 0 : index
    %c0_2 = arith.constant 0 : index
    %1 = vector.load %arg2[%c0_1, %c0_2] : memref<32x32xf32, #tpu.memory_space<vmem>>, vector<32x32xf32>
    %cst = arith.constant 0.000000e+00 : f32
    %2 = vector.broadcast %cst : f32 to vector<32x32xf32>
    %3 = arith.maximumf %1, %2 : vector<32x32xf32>
    %4 = math.absf %1 : vector<32x32xf32>
    %cst_3 = arith.constant 0.000000e+00 : f32
    %5 = vector.broadcast %cst_3 : f32 to vector<32x32xf32>
    %6 = arith.subf %5, %4 : vector<32x32xf32>
    %7 = math.exp %6 : vector<32x32xf32>
    %cst_4 = arith.constant 1.000000e+00 : f32
    %8 = vector.broadcast %cst_4 : f32 to vector<32x32xf32>
    %9 = arith.addf %8, %7 : vector<32x32xf32>
    %10 = math.log %9 : vector<32x32xf32>
    %11 = arith.addf %3, %10 : vector<32x32xf32>
    %c0_5 = arith.constant 0 : index
    %c0_6 = arith.constant 0 : index
    %12 = vector.load %arg3[%c0_5, %c0_6] : memref<32x32xf32, #tpu.memory_space<vmem>>, vector<32x32xf32>
    %c0_7 = arith.constant 0 : index
    %c0_8 = arith.constant 0 : index
    %13 = vector.load %arg1[%c0_7, %c0_8] : memref<32x32xf32, #tpu.memory_space<vmem>>, vector<32x32xf32>
    %14 = arith.mulf %11, %12 : vector<32x32xf32>
    %15 = arith.addf %13, %14 : vector<32x32xf32>
    %c0_9 = arith.constant 0 : index
    %c0_10 = arith.constant 0 : index
    %16 = vector.load %arg5[%c0_9, %c0_10] : memref<1x32xf32, #tpu.memory_space<vmem>>, vector<1x32xf32>
    %cst_11 = arith.constant 0.000000e+00 : f32
    %17 = vector.broadcast %cst_11 : f32 to vector<1x32xf32>
    %18 = arith.maximumf %16, %17 : vector<1x32xf32>
    %19 = math.absf %16 : vector<1x32xf32>
    %cst_12 = arith.constant 0.000000e+00 : f32
    %20 = vector.broadcast %cst_12 : f32 to vector<1x32xf32>
    %21 = arith.subf %20, %19 : vector<1x32xf32>
    %22 = math.exp %21 : vector<1x32xf32>
    %cst_13 = arith.constant 1.000000e+00 : f32
    %23 = vector.broadcast %cst_13 : f32 to vector<1x32xf32>
    %24 = arith.addf %23, %22 : vector<1x32xf32>
    %25 = math.log %24 : vector<1x32xf32>
    %26 = arith.addf %18, %25 : vector<1x32xf32>
    %c0_14 = arith.constant 0 : index
    %c0_15 = arith.constant 0 : index
    %27 = vector.load %arg6[%c0_14, %c0_15] : memref<1x32xf32, #tpu.memory_space<vmem>>, vector<1x32xf32>
    %c0_16 = arith.constant 0 : index
    %c0_17 = arith.constant 0 : index
    %28 = vector.load %arg4[%c0_16, %c0_17] : memref<1x32xf32, #tpu.memory_space<vmem>>, vector<1x32xf32>
    %29 = arith.mulf %26, %27 : vector<1x32xf32>
    %30 = arith.addf %28, %29 : vector<1x32xf32>
    %31 = arith.mulf %15, %15 : vector<32x32xf32>
    %32 = vector.shape_cast %31 : vector<32x32xf32> to vector<1x32x32xf32>
    %cst_18 = arith.constant dense<0.000000e+00> : vector<1xf32>
    %33 = vector.multi_reduction <add>, %32, %cst_18 [1, 2] : vector<1x32x32xf32> to vector<1xf32>
    %34 = vector.shape_cast %33 : vector<1xf32> to vector<1x1x1xf32>
    %35 = vector.extract %34[0, 0, 0] : f32 from vector<1x1x1xf32>
    %36 = arith.mulf %30, %30 : vector<1x32xf32>
    %37 = vector.shape_cast %36 : vector<1x32xf32> to vector<1x1x32xf32>
    %cst_19 = arith.constant dense<0.000000e+00> : vector<1xf32>
    %38 = vector.multi_reduction <add>, %37, %cst_19 [1, 2] : vector<1x1x32xf32> to vector<1xf32>
    %39 = vector.shape_cast %38 : vector<1xf32> to vector<1x1x1xf32>
    %40 = vector.extract %39[0, 0, 0] : f32 from vector<1x1x1xf32>
    %41 = arith.addf %35, %40 : f32
    %cst_20 = arith.constant 0.000000e+00 : f32
    %42 = arith.subf %cst_20, %41 : f32
    %cst_21 = arith.constant 0.013888889 : f32
    %43 = arith.mulf %42, %cst_21 : f32
    %cst_22 = arith.constant 2862.49707 : f32
    %44 = arith.subf %43, %cst_22 : f32
    %cst_23 = arith.constant -2.000000e+01 : f32
    %45 = vector.broadcast %cst_23 : f32 to vector<32x32xf32>
    %46 = arith.cmpf olt, %1, %45 : vector<32x32xf32>
    %47 = math.log %11 : vector<32x32xf32>
    %48 = arith.select %46, %1, %47 : vector<32x32xi1>, vector<32x32xf32>
    %cst_24 = arith.constant -2.000000e+01 : f32
    %49 = vector.broadcast %cst_24 : f32 to vector<1x32xf32>
    %50 = arith.cmpf olt, %16, %49 : vector<1x32xf32>
    %51 = math.log %26 : vector<1x32xf32>
    %52 = arith.select %50, %16, %51 : vector<1x32xi1>, vector<1x32xf32>
    %53 = arith.mulf %12, %12 : vector<32x32xf32>
    %cst_25 = arith.constant -5.000000e-01 : f32
    %54 = vector.broadcast %cst_25 : f32 to vector<32x32xf32>
    %55 = arith.mulf %54, %53 : vector<32x32xf32>
    %56 = arith.subf %55, %48 : vector<32x32xf32>
    %57 = vector.shape_cast %56 : vector<32x32xf32> to vector<1x32x32xf32>
    %cst_26 = arith.constant dense<0.000000e+00> : vector<1xf32>
    %58 = vector.multi_reduction <add>, %57, %cst_26 [1, 2] : vector<1x32x32xf32> to vector<1xf32>
    %59 = vector.shape_cast %58 : vector<1xf32> to vector<1x1x1xf32>
    %60 = vector.extract %59[0, 0, 0] : f32 from vector<1x1x1xf32>
    %61 = arith.mulf %27, %27 : vector<1x32xf32>
    %cst_27 = arith.constant -5.000000e-01 : f32
    %62 = vector.broadcast %cst_27 : f32 to vector<1x32xf32>
    %63 = arith.mulf %62, %61 : vector<1x32xf32>
    %64 = arith.subf %63, %52 : vector<1x32xf32>
    %65 = vector.shape_cast %64 : vector<1x32xf32> to vector<1x1x32xf32>
    %cst_28 = arith.constant dense<0.000000e+00> : vector<1xf32>
    %66 = vector.multi_reduction <add>, %65, %cst_28 [1, 2] : vector<1x1x32xf32> to vector<1xf32>
    %67 = vector.shape_cast %66 : vector<1xf32> to vector<1x1x1xf32>
    %68 = vector.extract %67[0, 0, 0] : f32 from vector<1x1x1xf32>
    %69 = arith.addf %60, %68 : f32
    %cst_29 = arith.constant 970.399108 : f32
    %70 = arith.subf %69, %cst_29 : f32
    %cst_30 = arith.constant dense<0.000000e+00> : vector<8x32xf32>
    %71 = tpu.matmul %0, %15, %cst_30 {dimension_numbers = #tpu.dot_dimension_numbers<[1], [0], [0], [1], [0, 0, 1, 1], [], []>} : vector<8x32xf32>, vector<32x32xf32>, vector<8x32xf32> -> vector<8x32xf32>
    %72 = vector.broadcast %30 : vector<1x32xf32> to vector<8x32xf32>
    %73 = arith.addf %71, %72 : vector<8x32xf32>
    %cst_31 = arith.constant 0.000000e+00 : f32
    %74 = vector.broadcast %cst_31 : f32 to vector<8x32xf32>
    %75 = arith.subf %74, %73 : vector<8x32xf32>
    %76 = math.exp %75 : vector<8x32xf32>
    %cst_32 = arith.constant 1.000000e+00 : f32
    %77 = vector.broadcast %cst_32 : f32 to vector<8x32xf32>
    %78 = arith.addf %77, %76 : vector<8x32xf32>
    %cst_33 = arith.constant 1.000000e+00 : f32
    %79 = vector.broadcast %cst_33 : f32 to vector<8x32xf32>
    %80 = arith.divf %79, %78 : vector<8x32xf32>
    %c0_34 = arith.constant 0 : index
    %c0_35 = arith.constant 0 : index
    %81 = vector.load %arg8[%c0_34, %c0_35] : memref<32x32xf32, #tpu.memory_space<vmem>>, vector<32x32xf32>
    %cst_36 = arith.constant 0.000000e+00 : f32
    %82 = vector.broadcast %cst_36 : f32 to vector<32x32xf32>
    %83 = arith.maximumf %81, %82 : vector<32x32xf32>
    %84 = math.absf %81 : vector<32x32xf32>
    %cst_37 = arith.constant 0.000000e+00 : f32
    %85 = vector.broadcast %cst_37 : f32 to vector<32x32xf32>
    %86 = arith.subf %85, %84 : vector<32x32xf32>
    %87 = math.exp %86 : vector<32x32xf32>
    %cst_38 = arith.constant 1.000000e+00 : f32
    %88 = vector.broadcast %cst_38 : f32 to vector<32x32xf32>
    %89 = arith.addf %88, %87 : vector<32x32xf32>
    %90 = math.log %89 : vector<32x32xf32>
    %91 = arith.addf %83, %90 : vector<32x32xf32>
    %c0_39 = arith.constant 0 : index
    %c0_40 = arith.constant 0 : index
    %92 = vector.load %arg9[%c0_39, %c0_40] : memref<32x32xf32, #tpu.memory_space<vmem>>, vector<32x32xf32>
    %c0_41 = arith.constant 0 : index
    %c0_42 = arith.constant 0 : index
    %93 = vector.load %arg7[%c0_41, %c0_42] : memref<32x32xf32, #tpu.memory_space<vmem>>, vector<32x32xf32>
    %94 = arith.mulf %91, %92 : vector<32x32xf32>
    %95 = arith.addf %93, %94 : vector<32x32xf32>
    %c0_43 = arith.constant 0 : index
    %c0_44 = arith.constant 0 : index
    %96 = vector.load %arg11[%c0_43, %c0_44] : memref<1x32xf32, #tpu.memory_space<vmem>>, vector<1x32xf32>
    %cst_45 = arith.constant 0.000000e+00 : f32
    %97 = vector.broadcast %cst_45 : f32 to vector<1x32xf32>
    %98 = arith.maximumf %96, %97 : vector<1x32xf32>
    %99 = math.absf %96 : vector<1x32xf32>
    %cst_46 = arith.constant 0.000000e+00 : f32
    %100 = vector.broadcast %cst_46 : f32 to vector<1x32xf32>
    %101 = arith.subf %100, %99 : vector<1x32xf32>
    %102 = math.exp %101 : vector<1x32xf32>
    %cst_47 = arith.constant 1.000000e+00 : f32
    %103 = vector.broadcast %cst_47 : f32 to vector<1x32xf32>
    %104 = arith.addf %103, %102 : vector<1x32xf32>
    %105 = math.log %104 : vector<1x32xf32>
    %106 = arith.addf %98, %105 : vector<1x32xf32>
    %c0_48 = arith.constant 0 : index
    %c0_49 = arith.constant 0 : index
    %107 = vector.load %arg12[%c0_48, %c0_49] : memref<1x32xf32, #tpu.memory_space<vmem>>, vector<1x32xf32>
    %c0_50 = arith.constant 0 : index
    %c0_51 = arith.constant 0 : index
    %108 = vector.load %arg10[%c0_50, %c0_51] : memref<1x32xf32, #tpu.memory_space<vmem>>, vector<1x32xf32>
    %109 = arith.mulf %106, %107 : vector<1x32xf32>
    %110 = arith.addf %108, %109 : vector<1x32xf32>
    %111 = arith.mulf %95, %95 : vector<32x32xf32>
    %112 = vector.shape_cast %111 : vector<32x32xf32> to vector<1x32x32xf32>
    %cst_52 = arith.constant dense<0.000000e+00> : vector<1xf32>
    %113 = vector.multi_reduction <add>, %112, %cst_52 [1, 2] : vector<1x32x32xf32> to vector<1xf32>
    %114 = vector.shape_cast %113 : vector<1xf32> to vector<1x1x1xf32>
    %115 = vector.extract %114[0, 0, 0] : f32 from vector<1x1x1xf32>
    %116 = arith.mulf %110, %110 : vector<1x32xf32>
    %117 = vector.shape_cast %116 : vector<1x32xf32> to vector<1x1x32xf32>
    %cst_53 = arith.constant dense<0.000000e+00> : vector<1xf32>
    %118 = vector.multi_reduction <add>, %117, %cst_53 [1, 2] : vector<1x1x32xf32> to vector<1xf32>
    %119 = vector.shape_cast %118 : vector<1xf32> to vector<1x1x1xf32>
    %120 = vector.extract %119[0, 0, 0] : f32 from vector<1x1x1xf32>
    %121 = arith.addf %115, %120 : f32
    %cst_54 = arith.constant 0.000000e+00 : f32
    %122 = arith.subf %cst_54, %121 : f32
    %cst_55 = arith.constant 0.013888889 : f32
    %123 = arith.mulf %122, %cst_55 : f32
    %cst_56 = arith.constant 2862.49707 : f32
    %124 = arith.subf %123, %cst_56 : f32
    %cst_57 = arith.constant -2.000000e+01 : f32
    %125 = vector.broadcast %cst_57 : f32 to vector<32x32xf32>
    %126 = arith.cmpf olt, %81, %125 : vector<32x32xf32>
    %127 = math.log %91 : vector<32x32xf32>
    %128 = arith.select %126, %81, %127 : vector<32x32xi1>, vector<32x32xf32>
    %cst_58 = arith.constant -2.000000e+01 : f32
    %129 = vector.broadcast %cst_58 : f32 to vector<1x32xf32>
    %130 = arith.cmpf olt, %96, %129 : vector<1x32xf32>
    %131 = math.log %106 : vector<1x32xf32>
    %132 = arith.select %130, %96, %131 : vector<1x32xi1>, vector<1x32xf32>
    %133 = arith.mulf %92, %92 : vector<32x32xf32>
    %cst_59 = arith.constant -5.000000e-01 : f32
    %134 = vector.broadcast %cst_59 : f32 to vector<32x32xf32>
    %135 = arith.mulf %134, %133 : vector<32x32xf32>
    %136 = arith.subf %135, %128 : vector<32x32xf32>
    %137 = vector.shape_cast %136 : vector<32x32xf32> to vector<1x32x32xf32>
    %cst_60 = arith.constant dense<0.000000e+00> : vector<1xf32>
    %138 = vector.multi_reduction <add>, %137, %cst_60 [1, 2] : vector<1x32x32xf32> to vector<1xf32>
    %139 = vector.shape_cast %138 : vector<1xf32> to vector<1x1x1xf32>
    %140 = vector.extract %139[0, 0, 0] : f32 from vector<1x1x1xf32>
    %141 = arith.mulf %107, %107 : vector<1x32xf32>
    %cst_61 = arith.constant -5.000000e-01 : f32
    %142 = vector.broadcast %cst_61 : f32 to vector<1x32xf32>
    %143 = arith.mulf %142, %141 : vector<1x32xf32>
    %144 = arith.subf %143, %132 : vector<1x32xf32>
    %145 = vector.shape_cast %144 : vector<1x32xf32> to vector<1x1x32xf32>
    %cst_62 = arith.constant dense<0.000000e+00> : vector<1xf32>
    %146 = vector.multi_reduction <add>, %145, %cst_62 [1, 2] : vector<1x1x32xf32> to vector<1xf32>
    %147 = vector.shape_cast %146 : vector<1xf32> to vector<1x1x1xf32>
    %148 = vector.extract %147[0, 0, 0] : f32 from vector<1x1x1xf32>
    %149 = arith.addf %140, %148 : f32
    %cst_63 = arith.constant 970.399108 : f32
    %150 = arith.subf %149, %cst_63 : f32
    %cst_64 = arith.constant dense<0.000000e+00> : vector<8x32xf32>
    %151 = tpu.matmul %80, %95, %cst_64 {dimension_numbers = #tpu.dot_dimension_numbers<[1], [0], [0], [1], [0, 0, 1, 1], [], []>} : vector<8x32xf32>, vector<32x32xf32>, vector<8x32xf32> -> vector<8x32xf32>
    %152 = vector.broadcast %110 : vector<1x32xf32> to vector<8x32xf32>
    %153 = arith.addf %151, %152 : vector<8x32xf32>
    %cst_65 = arith.constant 0.000000e+00 : f32
    %154 = vector.broadcast %cst_65 : f32 to vector<8x32xf32>
    %155 = arith.subf %154, %153 : vector<8x32xf32>
    %156 = math.exp %155 : vector<8x32xf32>
    %cst_66 = arith.constant 1.000000e+00 : f32
    %157 = vector.broadcast %cst_66 : f32 to vector<8x32xf32>
    %158 = arith.addf %157, %156 : vector<8x32xf32>
    %cst_67 = arith.constant 1.000000e+00 : f32
    %159 = vector.broadcast %cst_67 : f32 to vector<8x32xf32>
    %160 = arith.divf %159, %158 : vector<8x32xf32>
    %c0_68 = arith.constant 0 : index
    %c0_69 = arith.constant 0 : index
    %161 = vector.load %arg14[%c0_68, %c0_69] : memref<32x16xf32, #tpu.memory_space<vmem>>, vector<32x16xf32>
    %cst_70 = arith.constant 0.000000e+00 : f32
    %162 = vector.broadcast %cst_70 : f32 to vector<32x16xf32>
    %163 = arith.maximumf %161, %162 : vector<32x16xf32>
    %164 = math.absf %161 : vector<32x16xf32>
    %cst_71 = arith.constant 0.000000e+00 : f32
    %165 = vector.broadcast %cst_71 : f32 to vector<32x16xf32>
    %166 = arith.subf %165, %164 : vector<32x16xf32>
    %167 = math.exp %166 : vector<32x16xf32>
    %cst_72 = arith.constant 1.000000e+00 : f32
    %168 = vector.broadcast %cst_72 : f32 to vector<32x16xf32>
    %169 = arith.addf %168, %167 : vector<32x16xf32>
    %170 = math.log %169 : vector<32x16xf32>
    %171 = arith.addf %163, %170 : vector<32x16xf32>
    %c0_73 = arith.constant 0 : index
    %c0_74 = arith.constant 0 : index
    %172 = vector.load %arg15[%c0_73, %c0_74] : memref<32x16xf32, #tpu.memory_space<vmem>>, vector<32x16xf32>
    %c0_75 = arith.constant 0 : index
    %c0_76 = arith.constant 0 : index
    %173 = vector.load %arg13[%c0_75, %c0_76] : memref<32x16xf32, #tpu.memory_space<vmem>>, vector<32x16xf32>
    %174 = arith.mulf %171, %172 : vector<32x16xf32>
    %175 = arith.addf %173, %174 : vector<32x16xf32>
    %c0_77 = arith.constant 0 : index
    %c0_78 = arith.constant 0 : index
    %176 = vector.load %arg17[%c0_77, %c0_78] : memref<1x16xf32, #tpu.memory_space<vmem>>, vector<1x16xf32>
    %cst_79 = arith.constant 0.000000e+00 : f32
    %177 = vector.broadcast %cst_79 : f32 to vector<1x16xf32>
    %178 = arith.maximumf %176, %177 : vector<1x16xf32>
    %179 = math.absf %176 : vector<1x16xf32>
    %cst_80 = arith.constant 0.000000e+00 : f32
    %180 = vector.broadcast %cst_80 : f32 to vector<1x16xf32>
    %181 = arith.subf %180, %179 : vector<1x16xf32>
    %182 = math.exp %181 : vector<1x16xf32>
    %cst_81 = arith.constant 1.000000e+00 : f32
    %183 = vector.broadcast %cst_81 : f32 to vector<1x16xf32>
    %184 = arith.addf %183, %182 : vector<1x16xf32>
    %185 = math.log %184 : vector<1x16xf32>
    %186 = arith.addf %178, %185 : vector<1x16xf32>
    %c0_82 = arith.constant 0 : index
    %c0_83 = arith.constant 0 : index
    %187 = vector.load %arg18[%c0_82, %c0_83] : memref<1x16xf32, #tpu.memory_space<vmem>>, vector<1x16xf32>
    %c0_84 = arith.constant 0 : index
    %c0_85 = arith.constant 0 : index
    %188 = vector.load %arg16[%c0_84, %c0_85] : memref<1x16xf32, #tpu.memory_space<vmem>>, vector<1x16xf32>
    %189 = arith.mulf %186, %187 : vector<1x16xf32>
    %190 = arith.addf %188, %189 : vector<1x16xf32>
    %191 = arith.mulf %175, %175 : vector<32x16xf32>
    %192 = vector.shape_cast %191 : vector<32x16xf32> to vector<1x32x16xf32>
    %cst_86 = arith.constant dense<0.000000e+00> : vector<1xf32>
    %193 = vector.multi_reduction <add>, %192, %cst_86 [1, 2] : vector<1x32x16xf32> to vector<1xf32>
    %194 = vector.shape_cast %193 : vector<1xf32> to vector<1x1x1xf32>
    %195 = vector.extract %194[0, 0, 0] : f32 from vector<1x1x1xf32>
    %196 = arith.mulf %190, %190 : vector<1x16xf32>
    %197 = vector.shape_cast %196 : vector<1x16xf32> to vector<1x1x16xf32>
    %cst_87 = arith.constant dense<0.000000e+00> : vector<1xf32>
    %198 = vector.multi_reduction <add>, %197, %cst_87 [1, 2] : vector<1x1x16xf32> to vector<1xf32>
    %199 = vector.shape_cast %198 : vector<1xf32> to vector<1x1x1xf32>
    %200 = vector.extract %199[0, 0, 0] : f32 from vector<1x1x1xf32>
    %201 = arith.addf %195, %200 : f32
    %cst_88 = arith.constant 0.000000e+00 : f32
    %202 = arith.subf %cst_88, %201 : f32
    %cst_89 = arith.constant 0.013888889 : f32
    %203 = arith.mulf %202, %cst_89 : f32
    %cst_90 = arith.constant 1431.24854 : f32
    %204 = arith.subf %203, %cst_90 : f32
    %cst_91 = arith.constant -2.000000e+01 : f32
    %205 = vector.broadcast %cst_91 : f32 to vector<32x16xf32>
    %206 = arith.cmpf olt, %161, %205 : vector<32x16xf32>
    %207 = math.log %171 : vector<32x16xf32>
    %208 = arith.select %206, %161, %207 : vector<32x16xi1>, vector<32x16xf32>
    %cst_92 = arith.constant -2.000000e+01 : f32
    %209 = vector.broadcast %cst_92 : f32 to vector<1x16xf32>
    %210 = arith.cmpf olt, %176, %209 : vector<1x16xf32>
    %211 = math.log %186 : vector<1x16xf32>
    %212 = arith.select %210, %176, %211 : vector<1x16xi1>, vector<1x16xf32>
    %213 = arith.mulf %172, %172 : vector<32x16xf32>
    %cst_93 = arith.constant -5.000000e-01 : f32
    %214 = vector.broadcast %cst_93 : f32 to vector<32x16xf32>
    %215 = arith.mulf %214, %213 : vector<32x16xf32>
    %216 = arith.subf %215, %208 : vector<32x16xf32>
    %217 = vector.shape_cast %216 : vector<32x16xf32> to vector<1x32x16xf32>
    %cst_94 = arith.constant dense<0.000000e+00> : vector<1xf32>
    %218 = vector.multi_reduction <add>, %217, %cst_94 [1, 2] : vector<1x32x16xf32> to vector<1xf32>
    %219 = vector.shape_cast %218 : vector<1xf32> to vector<1x1x1xf32>
    %220 = vector.extract %219[0, 0, 0] : f32 from vector<1x1x1xf32>
    %221 = arith.mulf %187, %187 : vector<1x16xf32>
    %cst_95 = arith.constant -5.000000e-01 : f32
    %222 = vector.broadcast %cst_95 : f32 to vector<1x16xf32>
    %223 = arith.mulf %222, %221 : vector<1x16xf32>
    %224 = arith.subf %223, %212 : vector<1x16xf32>
    %225 = vector.shape_cast %224 : vector<1x16xf32> to vector<1x1x16xf32>
    %cst_96 = arith.constant dense<0.000000e+00> : vector<1xf32>
    %226 = vector.multi_reduction <add>, %225, %cst_96 [1, 2] : vector<1x1x16xf32> to vector<1xf32>
    %227 = vector.shape_cast %226 : vector<1xf32> to vector<1x1x1xf32>
    %228 = vector.extract %227[0, 0, 0] : f32 from vector<1x1x1xf32>
    %229 = arith.addf %220, %228 : f32
    %cst_97 = arith.constant 485.199554 : f32
    %230 = arith.subf %229, %cst_97 : f32
    %cst_98 = arith.constant dense<0.000000e+00> : vector<8x16xf32>
    %231 = tpu.matmul %160, %175, %cst_98 {dimension_numbers = #tpu.dot_dimension_numbers<[1], [0], [0], [1], [0, 0, 1, 1], [], []>} : vector<8x32xf32>, vector<32x16xf32>, vector<8x16xf32> -> vector<8x16xf32>
    %232 = vector.broadcast %190 : vector<1x16xf32> to vector<8x16xf32>
    %233 = arith.addf %231, %232 : vector<8x16xf32>
    %cst_99 = arith.constant dense<0xFF800000> : vector<8xf32>
    %234 = vector.multi_reduction <maximumf>, %233, %cst_99 [1] : vector<8x16xf32> to vector<8xf32>
    %235 = vector.shape_cast %234 : vector<8xf32> to vector<8x1xf32>
    %236 = vector.broadcast %235 : vector<8x1xf32> to vector<8x16xf32>
    %237 = arith.subf %233, %236 : vector<8x16xf32>
    %238 = math.exp %237 : vector<8x16xf32>
    %cst_100 = arith.constant dense<0.000000e+00> : vector<8xf32>
    %239 = vector.multi_reduction <add>, %238, %cst_100 [1] : vector<8x16xf32> to vector<8xf32>
    %240 = vector.shape_cast %239 : vector<8xf32> to vector<8x1xf32>
    %241 = math.log %240 : vector<8x1xf32>
    %242 = vector.broadcast %241 : vector<8x1xf32> to vector<8x16xf32>
    %243 = arith.subf %237, %242 : vector<8x16xf32>
    %c0_101 = arith.constant 0 : index
    %c0_102 = arith.constant 0 : index
    %244 = vector.load %arg19[%c0_101, %c0_102] : memref<8x16xf32, #tpu.memory_space<vmem>>, vector<8x16xf32>
    tpu.vector_store %arg19[%c0_101, %c0_102], %243 {strides = array<i32>} : memref<8x16xf32, #tpu.memory_space<vmem>>, vector<8x16xf32>,
    %245 = arith.addf %44, %124 : f32
    %246 = arith.addf %245, %204 : f32
    %c0_103 = arith.constant 0 : index
    %247 = memref.load %arg20[%c0_103] : memref<1xf32, #tpu.memory_space<smem>>
    memref.store %246, %arg20[%c0_103] : memref<1xf32, #tpu.memory_space<smem>>
    %248 = arith.addf %70, %150 : f32
    %249 = arith.addf %248, %230 : f32
    %c0_104 = arith.constant 0 : index
    %250 = memref.load %arg21[%c0_104] : memref<1xf32, #tpu.memory_space<smem>>
    memref.store %249, %arg21[%c0_104] : memref<1xf32, #tpu.memory_space<smem>>
    return
  }
}

</mosaic_0001>

<llo_original>
// kernel: tpu_custom_call.1
$region0: #{tpu_custom_call.1}
  #allocation0 [shape = 'u32[]', space=smem, size = 0x4, offset = 0x4, fixed_abs, tag = 'smem constant byte address 0x4 - core index']
  #allocation1 [shape = 'u32[72,128]{1,0:T(1,128)}', space=vmem, size = 0x9000, scoped, tag = 'internal scratch']
  %s0 = inlined_call_operand.vmem [shape: f32[8,32], index: 0, kind: input, shape index: {}]
  %s1 = inlined_call_operand.vmem [shape: f32[32,32], index: 1, kind: input, shape index: {}]
  %s2 = inlined_call_operand.vmem [shape: f32[32,32], index: 2, kind: input, shape index: {}]
  %s3 = inlined_call_operand.vmem [shape: f32[32,32], index: 3, kind: input, shape index: {}]
  %s4 = inlined_call_operand.vmem [shape: f32[1,32], index: 4, kind: input, shape index: {}]
  %s5 = inlined_call_operand.vmem [shape: f32[1,32], index: 5, kind: input, shape index: {}]
  %s6 = inlined_call_operand.vmem [shape: f32[1,32], index: 6, kind: input, shape index: {}]
  %s7 = inlined_call_operand.hbm [shape: f32[32,32], index: 7, kind: input, shape index: {}]
  %s8 = inlined_call_operand.hbm [shape: f32[32,32], index: 8, kind: input, shape index: {}]
  %s9 = inlined_call_operand.hbm [shape: f32[32,32], index: 9, kind: input, shape index: {}]
  %s10 = inlined_call_operand.vmem [shape: f32[1,32], index: 10, kind: input, shape index: {}]
  %s11 = inlined_call_operand.vmem [shape: f32[1,32], index: 11, kind: input, shape index: {}]
  %s12 = inlined_call_operand.vmem [shape: f32[1,32], index: 12, kind: input, shape index: {}]
  %s13 = inlined_call_operand.vmem [shape: f32[32,16], index: 13, kind: input, shape index: {}]
  %s14 = inlined_call_operand.vmem [shape: f32[32,16], index: 14, kind: input, shape index: {}]
  %s15 = inlined_call_operand.vmem [shape: f32[32,16], index: 15, kind: input, shape index: {}]
  %s16 = inlined_call_operand.vmem [shape: f32[1,16], index: 16, kind: input, shape index: {}]
  %s17 = inlined_call_operand.vmem [shape: f32[1,16], index: 17, kind: input, shape index: {}]
  %s18 = inlined_call_operand.vmem [shape: f32[1,16], index: 18, kind: input, shape index: {}]
  %s19 = inlined_call_operand.hbm [shape: f32[8,16], index: 19, kind: output, shape index: {0}]
  %s20 = inlined_call_operand.hbm [shape: f32[1], index: 20, kind: output, shape index: {1}]
  %s21 = inlined_call_operand.hbm [shape: f32[1], index: 21, kind: output, shape index: {2}]
  %22 = xla_tuple %s19, %s20, %s21
  %s23 = sld [smem:[#allocation0]]
  $region114: #{tpu_custom_call.1} parent=0
    _
  %s25 = ssub.s32 1, %s23
  %s26 = scalar_select 0, %s25, %s23
  $region1: #{tpu_custom_call.1} parent=0
    #allocation2 [shape = 'u8[16384]{0}', space=vmem, size = 0x4000, scoped, tag = 'input window, operand 7, single buffered']
    #allocation3 [shape = 's32[1]{0}', space=sflag, size = 0x4, scoped, tag = 'scoped memory for tpu_custom_call.1']
    #allocation4 [shape = 's32[1]{0}', space=sflag, size = 0x4, scoped, tag = 'scoped memory for tpu_custom_call.1']
    #allocation5 [shape = 's32[1]{0}', space=sflag, size = 0x4, scoped, tag = 'scoped memory for tpu_custom_call.1']
    #allocation6 [shape = 'u8[16384]{0}', space=vmem, size = 0x4000, scoped, tag = 'input window, operand 8, single buffered']
    #allocation7 [shape = 's32[1]{0}', space=sflag, size = 0x4, scoped, tag = 'scoped memory for tpu_custom_call.1']
    #allocation8 [shape = 'u8[16384]{0}', space=vmem, size = 0x4000, scoped, tag = 'input window, operand 9, single buffered']
    #allocation9 [shape = 'u8[4096]{0}', space=vmem, size = 0x1000, scoped, tag = 'output window, operand 0, single buffered']
    #allocation10 [shape = 'u8[512]{0}', space=smem, size = 0x200, scoped, tag = 'output window, operand 1, single buffered']
    #allocation11 [shape = 'u8[512]{0}', space=smem, size = 0x200, scoped, tag = 'output window, operand 2, single buffered']
    #allocation12 [shape = 's32[1]{0}', space=sflag, size = 0x4, scoped, tag = 'scoped memory for tpu_custom_call.1']
    %27 = vsyncpa [#allocation3], 0
    %28 = vsyncpa [#allocation7], 0
    %29 = vsyncpa [#allocation4], 0
    %30 = vsyncpa [#allocation5], 0
    %31 = vsyncpa [#allocation12], 0
    // Predicated region
    $region2: #{tpu_custom_call.1} parent=1 // pred_check
      _
    $region3: #{tpu_custom_call.1} parent=1 // pred_check_branch
      %33 = sbr.rel (0) target = $region5
    $region4: #{tpu_custom_call.1} parent=1 // pred_region
      _
    $region5: #{tpu_custom_call.1} parent=1 // pred_fallthru
      _
    // Predicated region
    $region6: #{tpu_custom_call.1} parent=1 // pred_check
      _
    $region7: #{tpu_custom_call.1} parent=1 // pred_check_branch
      %35 = sbr.rel (0) target = $region9
    $region8: #{tpu_custom_call.1} parent=1 // pred_region
      _
    $region9: #{tpu_custom_call.1} parent=1 // pred_fallthru
      _
    // Predicated region
    $region10: #{tpu_custom_call.1} parent=1 // pred_check
      _
    $region11: #{tpu_custom_call.1} parent=1 // pred_check_branch
      %37 = sbr.rel (0) target = $region13
    $region12: #{tpu_custom_call.1} parent=1 // pred_region
      _
    $region13: #{tpu_custom_call.1} parent=1 // pred_fallthru
      _
    // Predicated region
    $region14: #{tpu_custom_call.1} parent=1 // pred_check
      _
    $region15: #{tpu_custom_call.1} parent=1 // pred_check_branch
      %39 = sbr.rel (0) target = $region17
    $region16: #{tpu_custom_call.1} parent=1 // pred_region
      _
    $region17: #{tpu_custom_call.1} parent=1 // pred_fallthru
      _
    // Predicated region
    $region18: #{tpu_custom_call.1} parent=1 // pred_check
      _
    $region19: #{tpu_custom_call.1} parent=1 // pred_check_branch
      %41 = sbr.rel (0) target = $region21
    $region20: #{tpu_custom_call.1} parent=1 // pred_region
      _
    $region21: #{tpu_custom_call.1} parent=1 // pred_fallthru
      _
    // Predicated region
    $region22: #{tpu_custom_call.1} parent=1 // pred_check
      _
    $region23: #{tpu_custom_call.1} parent=1 // pred_check_branch
      %43 = sbr.rel (0) target = $region25
    $region24: #{tpu_custom_call.1} parent=1 // pred_region
      _
    $region25: #{tpu_custom_call.1} parent=1 // pred_fallthru
      _
    // Predicated region
    $region26: #{tpu_custom_call.1} parent=1 // pred_check
      _
    $region27: #{tpu_custom_call.1} parent=1 // pred_check_branch
      %45 = sbr.rel (0) target = $region29
    $region28: #{tpu_custom_call.1} parent=1 // pred_region
      _
    $region29: #{tpu_custom_call.1} parent=1 // pred_fallthru
      _
    // Predicated region
    $region30: #{tpu_custom_call.1} parent=1 // pred_check
      _
    $region31: #{tpu_custom_call.1} parent=1 // pred_check_branch
      %47 = sbr.rel (0) target = $region33
    $region32: #{tpu_custom_call.1} parent=1 // pred_region
      %49 = vsyncadd [#allocation3], 0
      %s50 = sshll.u32 %s7, 4
      %s51 = int_to_ptr.hbm [resolvable:$true] %s50
      %s52 = sshll.u32 [#allocation2], 4
      %s53 = int_to_ptr.vmem [resolvable:$true] %s52
      %58 = dma.hbm_to_vmem [thread:$0]  %s51, 512, %s53, [#allocation3], 128, 128, 8
    $region33: #{tpu_custom_call.1} parent=1 // pred_fallthru
      _
    // Predicated region
    $region34: #{tpu_custom_call.1} parent=1 // pred_check
      _
    $region35: #{tpu_custom_call.1} parent=1 // pred_check_branch
      %60 = sbr.rel (0) target = $region37
    $region36: #{tpu_custom_call.1} parent=1 // pred_region
      %62 = vsyncadd [#allocation7], 0
      %s63 = sshll.u32 %s8, 4
      %s64 = int_to_ptr.hbm [resolvable:$true] %s63
      %s65 = sshll.u32 [#allocation6], 4
      %s66 = int_to_ptr.vmem [resolvable:$true] %s65
      %71 = dma.hbm_to_vmem [thread:$0]  %s64, 512, %s66, [#allocation7], 128, 128, 8
    $region37: #{tpu_custom_call.1} parent=1 // pred_fallthru
      _
    // Predicated region
    $region38: #{tpu_custom_call.1} parent=1 // pred_check
      _
    $region39: #{tpu_custom_call.1} parent=1 // pred_check_branch
      %73 = sbr.rel (0) target = $region41
    $region40: #{tpu_custom_call.1} parent=1 // pred_region
      %75 = vsyncadd [#allocation7], 0
      %s76 = sshll.u32 %s9, 4
      %s77 = int_to_ptr.hbm [resolvable:$true] %s76
      %s78 = sshll.u32 [#allocation8], 4
      %s79 = int_to_ptr.vmem [resolvable:$true] %s78
      %84 = dma.hbm_to_vmem [thread:$0]  %s77, 512, %s79, [#allocation7], 128, 128, 8
    $region41: #{tpu_custom_call.1} parent=1 // pred_fallthru
      _
    // Predicated region
    $region42: #{tpu_custom_call.1} parent=1 // pred_check
      _
    $region43: #{tpu_custom_call.1} parent=1 // pred_check_branch
      %86 = sbr.rel (0) target = $region45
    $region44: #{tpu_custom_call.1} parent=1 // pred_region
      _
    $region45: #{tpu_custom_call.1} parent=1 // pred_fallthru
      _
    // Predicated region
    $region46: #{tpu_custom_call.1} parent=1 // pred_check
      _
    $region47: #{tpu_custom_call.1} parent=1 // pred_check_branch
      %88 = sbr.rel (0) target = $region49
    $region48: #{tpu_custom_call.1} parent=1 // pred_region
      _
    $region49: #{tpu_custom_call.1} parent=1 // pred_fallthru
      _
    // Predicated region
    $region50: #{tpu_custom_call.1} parent=1 // pred_check
      _
    $region51: #{tpu_custom_call.1} parent=1 // pred_check_branch
      %90 = sbr.rel (0) target = $region53
    $region52: #{tpu_custom_call.1} parent=1 // pred_region
      _
    $region53: #{tpu_custom_call.1} parent=1 // pred_fallthru
      _
    // Predicated region
    $region54: #{tpu_custom_call.1} parent=1 // pred_check
      _
    $region55: #{tpu_custom_call.1} parent=1 // pred_check_branch
      %92 = sbr.rel (0) target = $region57
    $region56: #{tpu_custom_call.1} parent=1 // pred_region
      _
    $region57: #{tpu_custom_call.1} parent=1 // pred_fallthru
      _
    // Predicated region
    $region58: #{tpu_custom_call.1} parent=1 // pred_check
      _
    $region59: #{tpu_custom_call.1} parent=1 // pred_check_branch
      %94 = sbr.rel (0) target = $region61
    $region60: #{tpu_custom_call.1} parent=1 // pred_region
      _
    $region61: #{tpu_custom_call.1} parent=1 // pred_fallthru
      _
    // Predicated region
    $region62: #{tpu_custom_call.1} parent=1 // pred_check
      _
    $region63: #{tpu_custom_call.1} parent=1 // pred_check_branch
      %96 = sbr.rel (0) target = $region65
    $region64: #{tpu_custom_call.1} parent=1 // pred_region
      _
    $region65: #{tpu_custom_call.1} parent=1 // pred_fallthru
      _
    // Predicated region
    $region66: #{tpu_custom_call.1} parent=1 // pred_check
      _
    $region67: #{tpu_custom_call.1} parent=1 // pred_check_branch
      %98 = sbr.rel (0) target = $region69
    $region68: #{tpu_custom_call.1} parent=1 // pred_region
      _
    $region69: #{tpu_custom_call.1} parent=1 // pred_fallthru
      _
    // Predicated region
    $region70: #{tpu_custom_call.1} parent=1 // pred_check
      _
    $region71: #{tpu_custom_call.1} parent=1 // pred_check_branch
      %100 = sbr.rel (0) target = $region73
    $region72: #{tpu_custom_call.1} parent=1 // pred_region
      _
    $region73: #{tpu_custom_call.1} parent=1 // pred_fallthru
      _
    // Predicated region
    $region74: #{tpu_custom_call.1} parent=1 // pred_check
      _
    $region75: #{tpu_custom_call.1} parent=1 // pred_check_branch
      %102 = sbr.rel (0) target = $region77
    $region76: #{tpu_custom_call.1} parent=1 // pred_region
      _
    $region77: #{tpu_custom_call.1} parent=1 // pred_fallthru
      _
    // Predicated region
    $region78: #{tpu_custom_call.1} parent=1 // pred_check
      _
    $region79: #{tpu_custom_call.1} parent=1 // pred_check_branch
      %104 = sbr.rel (0) target = $region81
    $region80: #{tpu_custom_call.1} parent=1 // pred_region
      %106 = dma.done [#allocation3], 512
    $region81: #{tpu_custom_call.1} parent=1 // pred_fallthru
      _
    // Predicated region
    $region82: #{tpu_custom_call.1} parent=1 // pred_check
      _
    $region83: #{tpu_custom_call.1} parent=1 // pred_check_branch
      %108 = sbr.rel (0) target = $region85
    $region84: #{tpu_custom_call.1} parent=1 // pred_region
      %110 = dma.done [#allocation7], 512
    $region85: #{tpu_custom_call.1} parent=1 // pred_fallthru
      _
    // Predicated region
    $region86: #{tpu_custom_call.1} parent=1 // pred_check
      _
    $region87: #{tpu_custom_call.1} parent=1 // pred_check_branch
      %112 = sbr.rel (0) target = $region89
    $region88: #{tpu_custom_call.1} parent=1 // pred_region
      %114 = dma.done [#allocation7], 512
    $region89: #{tpu_custom_call.1} parent=1 // pred_fallthru
      _
    %v115 = vld [vmem:[%s0] sm:$0xff]
    %v116 = vld [vmem:[%s2] sm:$0xff]
    %v117 = vld [vmem:[%s2 + $0x8] sm:$0xff]
    %v118 = vld [vmem:[%s2 + $0x10] sm:$0xff]
    %v119 = vld [vmem:[%s2 + $0x18] sm:$0xff]
    %v120 = vmax.f32 %v116, 0.0
    %v121 = vmax.f32 %v117, 0.0
    %v122 = vmax.f32 %v118, 0.0
    %v123 = vmax.f32 %v119, 0.0
    %v124 = vand.u32 2147483647, %v116
    %v125 = vand.u32 2147483647, %v117
    %v126 = vand.u32 2147483647, %v118
    %v127 = vand.u32 2147483647, %v119
    %v128 = vsub.f32 0.0, %v124
    %v129 = vsub.f32 0.0, %v125
    %v130 = vsub.f32 0.0, %v126
    %v131 = vsub.f32 0.0, %v127
    %v132 = vmul.f32 %v128, 1.442695
    %v133 = vpow.pop %v132
    %v134 = vmul.f32 %v129, 1.442695
    %v135 = vpow.pop %v134
    %v136 = vmul.f32 %v130, 1.442695
    %v137 = vpow.pop %v136
    %v138 = vmul.f32 %v131, 1.442695
    %v139 = vpow.pop %v138
    %v140 = vadd.f32 %v133, 1.0
    %v141 = vadd.f32 %v135, 1.0
    %v142 = vadd.f32 %v137, 1.0
    %v143 = vadd.f32 %v139, 1.0
    %v144 = vlog2.pop %v140
    %v145 = vmul.f32 %v144, 0.6931472
    %v146 = vlog2.pop %v141
    %v147 = vmul.f32 %v146, 0.6931472
    %v148 = vlog2.pop %v142
    %v149 = vmul.f32 %v148, 0.6931472
    %v150 = vlog2.pop %v143
    %v151 = vmul.f32 %v150, 0.6931472
    %v152 = vadd.f32 %v120, %v145
    %v153 = vadd.f32 %v121, %v147
    %v154 = vadd.f32 %v122, %v149
    %v155 = vadd.f32 %v123, %v151
    %v156 = vld [vmem:[%s3] sm:$0xff]
    %v157 = vld [vmem:[%s3 + $0x8] sm:$0xff]
    %v158 = vld [vmem:[%s3 + $0x10] sm:$0xff]
    %v159 = vld [vmem:[%s3 + $0x18] sm:$0xff]
    %v160 = vld [vmem:[%s1] sm:$0xff]
    %v161 = vld [vmem:[%s1 + $0x8] sm:$0xff]
    %v162 = vld [vmem:[%s1 + $0x10] sm:$0xff]
    %v163 = vld [vmem:[%s1 + $0x18] sm:$0xff]
    %v164 = vmul.f32 %v152, %v156
    %v165 = vmul.f32 %v153, %v157
    %v166 = vmul.f32 %v154, %v158
    %v167 = vmul.f32 %v155, %v159
    %v168 = vadd.f32 %v160, %v164
    %v169 = vadd.f32 %v161, %v165
    %v170 = vadd.f32 %v162, %v166
    %v171 = vadd.f32 %v163, %v167
    %v172 = vld [vmem:[%s5] sm:$0x1]
    %v173 = vmax.f32 %v172, 0.0
    %v174 = vand.u32 2147483647, %v172
    %v175 = vsub.f32 0.0, %v174
    %v176 = vmul.f32 %v175, 1.442695
    %v177 = vpow.pop %v176
    %v178 = vadd.f32 %v177, 1.0
    %v179 = vlog2.pop %v178
    %v180 = vmul.f32 %v179, 0.6931472
    %v181 = vadd.f32 %v173, %v180
    %v182 = vld [vmem:[%s6] sm:$0x1]
    %v183 = vld [vmem:[%s4] sm:$0x1]
    %v184 = vmul.f32 %v181, %v182
    %v185 = vadd.f32 %v183, %v184
    %v186 = vmul.f32 %v168, %v168
    %v187 = vmul.f32 %v169, %v169
    %v188 = vmul.f32 %v170, %v170
    %v189 = vmul.f32 %v171, %v171
    %vm190 = vcmask 261120
    %v191 = vsel %vm190, %v186, 0.0
    %v192 = vsel %vm190, %v187, 0.0
    %v193 = vadd.f32 %v191, %v192
    %v194 = vsel %vm190, %v188, 0.0
    %v195 = vadd.f32 %v193, %v194
    %v196 = vsel %vm190, %v189, 0.0
    %v197 = vadd.f32 %v195, %v196
    %198 = vadd.xlane.f32.xlu0 %v197
    %v199 = vpop.xlane.xlu0 %198
    %v200 = vrot.slane %v199, 4
    %v201 = vadd.f32 %v199, %v200
    %v202 = vrot.slane %v201, 2
    %v203 = vadd.f32 %v201, %v202
    %v204 = vrot.slane %v203, 1
    %v205 = vadd.f32 %v203, %v204
    %s206 = vtos %v205
    %v207 = vmul.f32 %v185, %v185
    %vm208 = vcmask 253952
    %v209 = vsel %vm208, %v207, 0.0
    %210 = vadd.xlane.f32.xlu0 %v209
    %v211 = vpop.xlane.xlu0 %210
    %v212 = vrot.slane %v211, 4
    %v213 = vadd.f32 %v211, %v212
    %v214 = vrot.slane %v213, 2
    %v215 = vadd.f32 %v213, %v214
    %v216 = vrot.slane %v215, 1
    %v217 = vadd.f32 %v215, %v216
    %s218 = vtos %v217
    %s219 = sadd.f32 %s206, %s218
    %s220 = ssub.f32 0.0, %s219
    %s221 = smul.f32 %s220, 0.013888889
    %s222 = ssub.f32 %s221, 2862.497
    %vm223 = vcmp.lt.f32.partialorder %v116, -20.0
    %vm224 = vcmp.lt.f32.partialorder %v117, -20.0
    %vm225 = vcmp.lt.f32.partialorder %v118, -20.0
    %vm226 = vcmp.lt.f32.partialorder %v119, -20.0
    %v227 = vlog2.pop %v152
    %v228 = vmul.f32 %v227, 0.6931472
    %v229 = vlog2.pop %v153
    %v230 = vmul.f32 %v229, 0.6931472
    %v231 = vlog2.pop %v154
    %v232 = vmul.f32 %v231, 0.6931472
    %v233 = vlog2.pop %v155
    %v234 = vmul.f32 %v233, 0.6931472
    %v235 = vsel %vm223, %v116, %v228
    %v236 = vsel %vm224, %v117, %v230
    %v237 = vsel %vm225, %v118, %v232
    %v238 = vsel %vm226, %v119, %v234
    %vm239 = vcmp.lt.f32.partialorder %v172, -20.0
    %v240 = vlog2.pop %v181
    %v241 = vmul.f32 %v240, 0.6931472
    %v242 = vsel %vm239, %v172, %v241
    %v243 = vmul.f32 %v156, %v156
    %v244 = vmul.f32 %v157, %v157
    %v245 = vmul.f32 %v158, %v158
    %v246 = vmul.f32 %v159, %v159
    %v247 = vmul.f32 %v243, -0.5
    %v248 = vmul.f32 %v244, -0.5
    %v249 = vmul.f32 %v245, -0.5
    %v250 = vmul.f32 %v246, -0.5
    %v251 = vsub.f32 %v247, %v235
    %v252 = vsub.f32 %v248, %v236
    %v253 = vsub.f32 %v249, %v237
    %v254 = vsub.f32 %v250, %v238
    %v255 = vsel %vm190, %v251, 0.0
    %v256 = vsel %vm190, %v252, 0.0
    %v257 = vadd.f32 %v255, %v256
    %v258 = vsel %vm190, %v253, 0.0
    %v259 = vadd.f32 %v257, %v258
    %v260 = vsel %vm190, %v254, 0.0
    %v261 = vadd.f32 %v259, %v260
    %262 = vadd.xlane.f32.xlu0 %v261
    %v263 = vpop.xlane.xlu0 %262
    %v264 = vrot.slane %v263, 4
    %v265 = vadd.f32 %v263, %v264
    %v266 = vrot.slane %v265, 2
    %v267 = vadd.f32 %v265, %v266
    %v268 = vrot.slane %v267, 1
    %v269 = vadd.f32 %v267, %v268
    %s270 = vtos %v269
    %v271 = vmul.f32 %v182, %v182
    %v272 = vmul.f32 %v271, -0.5
    %v273 = vsub.f32 %v272, %v242
    %v274 = vsel %vm208, %v273, 0.0
    %275 = vadd.xlane.f32.xlu0 %v274
    %v276 = vpop.xlane.xlu0 %275
    %v277 = vrot.slane %v276, 4
    %v278 = vadd.f32 %v276, %v277
    %v279 = vrot.slane %v278, 2
    %v280 = vadd.f32 %v278, %v279
    %v281 = vrot.slane %v280, 1
    %v282 = vadd.f32 %v280, %v281
    %s283 = vtos %v282
    %s284 = sadd.f32 %s270, %s283
    %s285 = ssub.f32 %s284, 970.3991
    %v287 = vperm.slane %v185, 0
    %v290 = vsel %vm190, %v115, 0
    %292 = vmatpush.msra.mxu0 0.0
    %293 = vmatpush.msra.mxu0 0.0
    %294 = vmatpush.msra.mxu0 0.0
    %295 = vmatpush.msra.mxu0 0.0
    %296 = vmatpush.msra.mxu0 0.0
    %297 = vmatpush.msra.mxu0 0.0
    %298 = vmatpush.msra.mxu0 0.0
    %299 = vmatpush.msra.mxu0 0.0
    %300 = vmatpush.msra.mxu0 0.0
    %301 = vmatpush.msra.mxu0 0.0
    %302 = vmatpush.msra.mxu0 0.0
    %303 = vmatpush.msra.mxu0 0.0
    %304 = vmatpush.msra.mxu0 %v171
    %305 = vmatpush.msra.mxu0 %v170
    %306 = vmatpush.msra.mxu0 %v169
    %307 = vmatpush.msra.mxu0 %v168
    %308 = vmatmul.f32.gmra.mxu0 %v290
    %v309 = vpop.f32.mrf.mxu0
    %v310 = vadd.f32 %v287, %v309
    %311 = vdwg.mxu0
    %v312 = vsub.f32 0.0, %v310
    %v313 = vmul.f32 %v312, 1.442695
    %v314 = vpow.pop %v313
    %v315 = vadd.f32 %v314, 1.0
    %v316 = vrcp.pop %v315
    %v317 = vmul.f32 %v315, %v316
    %v318 = vsub.f32 1.0, %v317
    %v319 = vmul.f32 %v316, %v318
    %v320 = vadd.f32 %v316, %v319
    %vm321 = vweird.f32 %v315
    %vm322 = vweird.f32 %v316
    %vm323 = vmor %vm321, %vm322
    %v324 = vsel %vm323, %v316, %v320
    %v325 = vand.u32 2147483647, %v315
    %vm326 = vcmp.eq.f32.partialorder %v325, 8.507059e+37
    %v327 = vand.u32 %v315, 2147483648
    %v328 = vor.u32 1.1754944e-38, %v327
    %v329 = vsel %vm326, %v328, %v324
    %v330 = vmul.f32 1.0, %v329
    %v331 = vld [vmem:[#allocation6] sm:$0xff]
    %v332 = vld [vmem:[#allocation6 + $0x8] sm:$0xff]
    %v333 = vld [vmem:[#allocation6 + $0x10] sm:$0xff]
    %v334 = vld [vmem:[#allocation6 + $0x18] sm:$0xff]
    %v335 = vmax.f32 %v331, 0.0
    %v336 = vmax.f32 %v332, 0.0
    %v337 = vmax.f32 %v333, 0.0
    %v338 = vmax.f32 %v334, 0.0
    %v339 = vand.u32 2147483647, %v331
    %v340 = vand.u32 2147483647, %v332
    %v341 = vand.u32 2147483647, %v333
    %v342 = vand.u32 2147483647, %v334
    %v343 = vsub.f32 0.0, %v339
    %v344 = vsub.f32 0.0, %v340
    %v345 = vsub.f32 0.0, %v341
    %v346 = vsub.f32 0.0, %v342
    %v347 = vmul.f32 %v343, 1.442695
    %v348 = vpow.pop %v347
    %v349 = vmul.f32 %v344, 1.442695
    %v350 = vpow.pop %v349
    %v351 = vmul.f32 %v345, 1.442695
    %v352 = vpow.pop %v351
    %v353 = vmul.f32 %v346, 1.442695
    %v354 = vpow.pop %v353
    %v355 = vadd.f32 %v348, 1.0
    %v356 = vadd.f32 %v350, 1.0
    %v357 = vadd.f32 %v352, 1.0
    %v358 = vadd.f32 %v354, 1.0
    %v359 = vlog2.pop %v355
    %v360 = vmul.f32 %v359, 0.6931472
    %v361 = vlog2.pop %v356
    %v362 = vmul.f32 %v361, 0.6931472
    %v363 = vlog2.pop %v357
    %v364 = vmul.f32 %v363, 0.6931472
    %v365 = vlog2.pop %v358
    %v366 = vmul.f32 %v365, 0.6931472
    %v367 = vadd.f32 %v335, %v360
    %v368 = vadd.f32 %v336, %v362
    %v369 = vadd.f32 %v337, %v364
    %v370 = vadd.f32 %v338, %v366
    %v371 = vld [vmem:[#allocation8] sm:$0xff]
    %v372 = vld [vmem:[#allocation8 + $0x8] sm:$0xff]
    %v373 = vld [vmem:[#allocation8 + $0x10] sm:$0xff]
    %v374 = vld [vmem:[#allocation8 + $0x18] sm:$0xff]
    %v375 = vld [vmem:[#allocation2] sm:$0xff]
    %v376 = vld [vmem:[#allocation2 + $0x8] sm:$0xff]
    %v377 = vld [vmem:[#allocation2 + $0x10] sm:$0xff]
    %v378 = vld [vmem:[#allocation2 + $0x18] sm:$0xff]
    %v379 = vmul.f32 %v367, %v371
    %v380 = vmul.f32 %v368, %v372
    %v381 = vmul.f32 %v369, %v373
    %v382 = vmul.f32 %v370, %v374
    %v383 = vadd.f32 %v375, %v379
    %v384 = vadd.f32 %v376, %v380
    %v385 = vadd.f32 %v377, %v381
    %v386 = vadd.f32 %v378, %v382
    %v387 = vld [vmem:[%s11] sm:$0x1]
    %v388 = vmax.f32 %v387, 0.0
    %v389 = vand.u32 2147483647, %v387
    %v390 = vsub.f32 0.0, %v389
    %v391 = vmul.f32 %v390, 1.442695
    %v392 = vpow.pop %v391
    %v393 = vadd.f32 %v392, 1.0
    %v394 = vlog2.pop %v393
    %v395 = vmul.f32 %v394, 0.6931472
    %v396 = vadd.f32 %v388, %v395
    %v397 = vld [vmem:[%s12] sm:$0x1]
    %v398 = vld [vmem:[%s10] sm:$0x1]
    %v399 = vmul.f32 %v396, %v397
    %v400 = vadd.f32 %v398, %v399
    %v401 = vmul.f32 %v383, %v383
    %v402 = vmul.f32 %v384, %v384
    %v403 = vmul.f32 %v385, %v385
    %v404 = vmul.f32 %v386, %v386
    %v405 = vsel %vm190, %v401, 0.0
    %v406 = vsel %vm190, %v402, 0.0
    %v407 = vadd.f32 %v405, %v406
    %v408 = vsel %vm190, %v403, 0.0
    %v409 = vadd.f32 %v407, %v408
    %v410 = vsel %vm190, %v404, 0.0
    %v411 = vadd.f32 %v409, %v410
    %412 = vadd.xlane.f32.xlu0 %v411
    %v413 = vpop.xlane.xlu0 %412
    %v414 = vrot.slane %v413, 4
    %v415 = vadd.f32 %v413, %v414
    %v416 = vrot.slane %v415, 2
    %v417 = vadd.f32 %v415, %v416
    %v418 = vrot.slane %v417, 1
    %v419 = vadd.f32 %v417, %v418
    %s420 = vtos %v419
    %v421 = vmul.f32 %v400, %v400
    %v422 = vsel %vm208, %v421, 0.0
    %423 = vadd.xlane.f32.xlu0 %v422
    %v424 = vpop.xlane.xlu0 %423
    %v425 = vrot.slane %v424, 4
    %v426 = vadd.f32 %v424, %v425
    %v427 = vrot.slane %v426, 2
    %v428 = vadd.f32 %v426, %v427
    %v429 = vrot.slane %v428, 1
    %v430 = vadd.f32 %v428, %v429
    %s431 = vtos %v430
    %s432 = sadd.f32 %s420, %s431
    %s433 = ssub.f32 0.0, %s432
    %s434 = smul.f32 %s433, 0.013888889
    %s435 = ssub.f32 %s434, 2862.497
    %vm436 = vcmp.lt.f32.partialorder %v331, -20.0
    %vm437 = vcmp.lt.f32.partialorder %v332, -20.0
    %vm438 = vcmp.lt.f32.partialorder %v333, -20.0
    %vm439 = vcmp.lt.f32.partialorder %v334, -20.0
    %v440 = vlog2.pop %v367
    %v441 = vmul.f32 %v440, 0.6931472
    %v442 = vlog2.pop %v368
    %v443 = vmul.f32 %v442, 0.6931472
    %v444 = vlog2.pop %v369
    %v445 = vmul.f32 %v444, 0.6931472
    %v446 = vlog2.pop %v370
    %v447 = vmul.f32 %v446, 0.6931472
    %v448 = vsel %vm436, %v331, %v441
    %v449 = vsel %vm437, %v332, %v443
    %v450 = vsel %vm438, %v333, %v445
    %v451 = vsel %vm439, %v334, %v447
    %vm452 = vcmp.lt.f32.partialorder %v387, -20.0
    %v453 = vlog2.pop %v396
    %v454 = vmul.f32 %v453, 0.6931472
    %v455 = vsel %vm452, %v387, %v454
    %v456 = vmul.f32 %v371, %v371
    %v457 = vmul.f32 %v372, %v372
    %v458 = vmul.f32 %v373, %v373
    %v459 = vmul.f32 %v374, %v374
    %v460 = vmul.f32 %v456, -0.5
    %v461 = vmul.f32 %v457, -0.5
    %v462 = vmul.f32 %v458, -0.5
    %v463 = vmul.f32 %v459, -0.5
    %v464 = vsub.f32 %v460, %v448
    %v465 = vsub.f32 %v461, %v449
    %v466 = vsub.f32 %v462, %v450
    %v467 = vsub.f32 %v463, %v451
    %v468 = vsel %vm190, %v464, 0.0
    %v469 = vsel %vm190, %v465, 0.0
    %v470 = vadd.f32 %v468, %v469
    %v471 = vsel %vm190, %v466, 0.0
    %v472 = vadd.f32 %v470, %v471
    %v473 = vsel %vm190, %v467, 0.0
    %v474 = vadd.f32 %v472, %v473
    %475 = vadd.xlane.f32.xlu0 %v474
    %v476 = vpop.xlane.xlu0 %475
    %v477 = vrot.slane %v476, 4
    %v478 = vadd.f32 %v476, %v477
    %v479 = vrot.slane %v478, 2
    %v480 = vadd.f32 %v478, %v479
    %v481 = vrot.slane %v480, 1
    %v482 = vadd.f32 %v480, %v481
    %s483 = vtos %v482
    %v484 = vmul.f32 %v397, %v397
    %v485 = vmul.f32 %v484, -0.5
    %v486 = vsub.f32 %v485, %v455
    %v487 = vsel %vm208, %v486, 0.0
    %488 = vadd.xlane.f32.xlu0 %v487
    %v489 = vpop.xlane.xlu0 %488
    %v490 = vrot.slane %v489, 4
    %v491 = vadd.f32 %v489, %v490
    %v492 = vrot.slane %v491, 2
    %v493 = vadd.f32 %v491, %v492
    %v494 = vrot.slane %v493, 1
    %v495 = vadd.f32 %v493, %v494
    %s496 = vtos %v495
    %s497 = sadd.f32 %s483, %s496
    %s498 = ssub.f32 %s497, 970.3991
    %v500 = vperm.slane %v400, 0
    %v503 = vsel %vm190, %v330, 0
    %505 = vmatpush.msra.mxu0 0.0
    %506 = vmatpush.msra.mxu0 0.0
    %507 = vmatpush.msra.mxu0 0.0
    %508 = vmatpush.msra.mxu0 0.0
    %509 = vmatpush.msra.mxu0 0.0
    %510 = vmatpush.msra.mxu0 0.0
    %511 = vmatpush.msra.mxu0 0.0
    %512 = vmatpush.msra.mxu0 0.0
    %513 = vmatpush.msra.mxu0 0.0
    %514 = vmatpush.msra.mxu0 0.0
    %515 = vmatpush.msra.mxu0 0.0
    %516 = vmatpush.msra.mxu0 0.0
    %517 = vmatpush.msra.mxu0 %v386
    %518 = vmatpush.msra.mxu0 %v385
    %519 = vmatpush.msra.mxu0 %v384
    %520 = vmatpush.msra.mxu0 %v383
    %521 = vmatmul.f32.gmra.mxu0 %v503
    %v522 = vpop.f32.mrf.mxu0
    %v523 = vadd.f32 %v500, %v522
    %524 = vdwg.mxu0
    %v525 = vsub.f32 0.0, %v523
    %v526 = vmul.f32 %v525, 1.442695
    %v527 = vpow.pop %v526
    %v528 = vadd.f32 %v527, 1.0
    %v529 = vrcp.pop %v528
    %v530 = vmul.f32 %v528, %v529
    %v531 = vsub.f32 1.0, %v530
    %v532 = vmul.f32 %v529, %v531
    %v533 = vadd.f32 %v529, %v532
    %vm534 = vweird.f32 %v528
    %vm535 = vweird.f32 %v529
    %vm536 = vmor %vm534, %vm535
    %v537 = vsel %vm536, %v529, %v533
    %v538 = vand.u32 2147483647, %v528
    %vm539 = vcmp.eq.f32.partialorder %v538, 8.507059e+37
    %v540 = vand.u32 %v528, 2147483648
    %v541 = vor.u32 1.1754944e-38, %v540
    %v542 = vsel %vm539, %v541, %v537
    %v543 = vmul.f32 1.0, %v542
    %v544 = vld [vmem:[%s14] sm:$0xff]
    %v545 = vld [vmem:[%s14 + $0x8] sm:$0xff]
    %v546 = vld [vmem:[%s14 + $0x10] sm:$0xff]
    %v547 = vld [vmem:[%s14 + $0x18] sm:$0xff]
    %v548 = vmax.f32 %v544, 0.0
    %v549 = vmax.f32 %v545, 0.0
    %v550 = vmax.f32 %v546, 0.0
    %v551 = vmax.f32 %v547, 0.0
    %v552 = vand.u32 2147483647, %v544
    %v553 = vand.u32 2147483647, %v545
    %v554 = vand.u32 2147483647, %v546
    %v555 = vand.u32 2147483647, %v547
    %v556 = vsub.f32 0.0, %v552
    %v557 = vsub.f32 0.0, %v553
    %v558 = vsub.f32 0.0, %v554
    %v559 = vsub.f32 0.0, %v555
    %v560 = vmul.f32 %v556, 1.442695
    %v561 = vpow.pop %v560
    %v562 = vmul.f32 %v557, 1.442695
    %v563 = vpow.pop %v562
    %v564 = vmul.f32 %v558, 1.442695
    %v565 = vpow.pop %v564
    %v566 = vmul.f32 %v559, 1.442695
    %v567 = vpow.pop %v566
    %v568 = vadd.f32 %v561, 1.0
    %v569 = vadd.f32 %v563, 1.0
    %v570 = vadd.f32 %v565, 1.0
    %v571 = vadd.f32 %v567, 1.0
    %v572 = vlog2.pop %v568
    %v573 = vmul.f32 %v572, 0.6931472
    %v574 = vlog2.pop %v569
    %v575 = vmul.f32 %v574, 0.6931472
    %v576 = vlog2.pop %v570
    %v577 = vmul.f32 %v576, 0.6931472
    %v578 = vlog2.pop %v571
    %v579 = vmul.f32 %v578, 0.6931472
    %v580 = vadd.f32 %v548, %v573
    %v581 = vadd.f32 %v549, %v575
    %v582 = vadd.f32 %v550, %v577
    %v583 = vadd.f32 %v551, %v579
    %v584 = vld [vmem:[%s15] sm:$0xff]
    %v585 = vld [vmem:[%s15 + $0x8] sm:$0xff]
    %v586 = vld [vmem:[%s15 + $0x10] sm:$0xff]
    %v587 = vld [vmem:[%s15 + $0x18] sm:$0xff]
    %v588 = vld [vmem:[%s13] sm:$0xff]
    %v589 = vld [vmem:[%s13 + $0x8] sm:$0xff]
    %v590 = vld [vmem:[%s13 + $0x10] sm:$0xff]
    %v591 = vld [vmem:[%s13 + $0x18] sm:$0xff]
    %v592 = vmul.f32 %v580, %v584
    %v593 = vmul.f32 %v581, %v585
    %v594 = vmul.f32 %v582, %v586
    %v595 = vmul.f32 %v583, %v587
    %v596 = vadd.f32 %v588, %v592
    %v597 = vadd.f32 %v589, %v593
    %v598 = vadd.f32 %v590, %v594
    %v599 = vadd.f32 %v591, %v595
    %v600 = vld [vmem:[%s17] sm:$0x1]
    %v601 = vmax.f32 %v600, 0.0
    %v602 = vand.u32 2147483647, %v600
    %v603 = vsub.f32 0.0, %v602
    %v604 = vmul.f32 %v603, 1.442695
    %v605 = vpow.pop %v604
    %v606 = vadd.f32 %v605, 1.0
    %v607 = vlog2.pop %v606
    %v608 = vmul.f32 %v607, 0.6931472
    %v609 = vadd.f32 %v601, %v608
    %v610 = vld [vmem:[%s18] sm:$0x1]
    %v611 = vld [vmem:[%s16] sm:$0x1]
    %v612 = vmul.f32 %v609, %v610
    %v613 = vadd.f32 %v611, %v612
    %v614 = vmul.f32 %v596, %v596
    %v615 = vmul.f32 %v597, %v597
    %v616 = vmul.f32 %v598, %v598
    %v617 = vmul.f32 %v599, %v599
    %vm618 = vcmask 130048
    %v619 = vsel %vm618, %v614, 0.0
    %v620 = vsel %vm618, %v615, 0.0
    %v621 = vadd.f32 %v619, %v620
    %v622 = vsel %vm618, %v616, 0.0
    %v623 = vadd.f32 %v621, %v622
    %v624 = vsel %vm618, %v617, 0.0
    %v625 = vadd.f32 %v623, %v624
    %626 = vadd.xlane.f32.xlu0 %v625
    %v627 = vpop.xlane.xlu0 %626
    %v628 = vrot.slane %v627, 4
    %v629 = vadd.f32 %v627, %v628
    %v630 = vrot.slane %v629, 2
    %v631 = vadd.f32 %v629, %v630
    %v632 = vrot.slane %v631, 1
    %v633 = vadd.f32 %v631, %v632
    %s634 = vtos %v633
    %v635 = vmul.f32 %v613, %v613
    %vm636 = vcmask 122880
    %v637 = vsel %vm636, %v635, 0.0
    %638 = vadd.xlane.f32.xlu0 %v637
    %v639 = vpop.xlane.xlu0 %638
    %v640 = vrot.slane %v639, 4
    %v641 = vadd.f32 %v639, %v640
    %v642 = vrot.slane %v641, 2
    %v643 = vadd.f32 %v641, %v642
    %v644 = vrot.slane %v643, 1
    %v645 = vadd.f32 %v643, %v644
    %s646 = vtos %v645
    %s647 = sadd.f32 %s634, %s646
    %s648 = ssub.f32 0.0, %s647
    %s649 = smul.f32 %s648, 0.013888889
    %s650 = ssub.f32 %s649, 1431.2485
    %vm651 = vcmp.lt.f32.partialorder %v544, -20.0
    %vm652 = vcmp.lt.f32.partialorder %v545, -20.0
    %vm653 = vcmp.lt.f32.partialorder %v546, -20.0
    %vm654 = vcmp.lt.f32.partialorder %v547, -20.0
    %v655 = vlog2.pop %v580
    %v656 = vmul.f32 %v655, 0.6931472
    %v657 = vlog2.pop %v581
    %v658 = vmul.f32 %v657, 0.6931472
    %v659 = vlog2.pop %v582
    %v660 = vmul.f32 %v659, 0.6931472
    %v661 = vlog2.pop %v583
    %v662 = vmul.f32 %v661, 0.6931472
    %v663 = vsel %vm651, %v544, %v656
    %v664 = vsel %vm652, %v545, %v658
    %v665 = vsel %vm653, %v546, %v660
    %v666 = vsel %vm654, %v547, %v662
    %vm667 = vcmp.lt.f32.partialorder %v600, -20.0
    %v668 = vlog2.pop %v609
    %v669 = vmul.f32 %v668, 0.6931472
    %v670 = vsel %vm667, %v600, %v669
    %v671 = vmul.f32 %v584, %v584
    %v672 = vmul.f32 %v585, %v585
    %v673 = vmul.f32 %v586, %v586
    %v674 = vmul.f32 %v587, %v587
    %v675 = vmul.f32 %v671, -0.5
    %v676 = vmul.f32 %v672, -0.5
    %v677 = vmul.f32 %v673, -0.5
    %v678 = vmul.f32 %v674, -0.5
    %v679 = vsub.f32 %v675, %v663
    %v680 = vsub.f32 %v676, %v664
    %v681 = vsub.f32 %v677, %v665
    %v682 = vsub.f32 %v678, %v666
    %v683 = vsel %vm618, %v679, 0.0
    %v684 = vsel %vm618, %v680, 0.0
    %v685 = vadd.f32 %v683, %v684
    %v686 = vsel %vm618, %v681, 0.0
    %v687 = vadd.f32 %v685, %v686
    %v688 = vsel %vm618, %v682, 0.0
    %v689 = vadd.f32 %v687, %v688
    %690 = vadd.xlane.f32.xlu0 %v689
    %v691 = vpop.xlane.xlu0 %690
    %v692 = vrot.slane %v691, 4
    %v693 = vadd.f32 %v691, %v692
    %v694 = vrot.slane %v693, 2
    %v695 = vadd.f32 %v693, %v694
    %v696 = vrot.slane %v695, 1
    %v697 = vadd.f32 %v695, %v696
    %s698 = vtos %v697
    %v699 = vmul.f32 %v610, %v610
    %v700 = vmul.f32 %v699, -0.5
    %v701 = vsub.f32 %v700, %v670
    %v702 = vsel %vm636, %v701, 0.0
    %703 = vadd.xlane.f32.xlu0 %v702
    %v704 = vpop.xlane.xlu0 %703
    %v705 = vrot.slane %v704, 4
    %v706 = vadd.f32 %v704, %v705
    %v707 = vrot.slane %v706, 2
    %v708 = vadd.f32 %v706, %v707
    %v709 = vrot.slane %v708, 1
    %v710 = vadd.f32 %v708, %v709
    %s711 = vtos %v710
    %s712 = sadd.f32 %s698, %s711
    %s713 = ssub.f32 %s712, 485.19955
    %v715 = vperm.slane %v613, 0
    %v718 = vsel %vm190, %v543, 0
    %720 = vmatpush.msra.mxu0 0.0
    %721 = vmatpush.msra.mxu0 0.0
    %722 = vmatpush.msra.mxu0 0.0
    %723 = vmatpush.msra.mxu0 0.0
    %724 = vmatpush.msra.mxu0 0.0
    %725 = vmatpush.msra.mxu0 0.0
    %726 = vmatpush.msra.mxu0 0.0
    %727 = vmatpush.msra.mxu0 0.0
    %728 = vmatpush.msra.mxu0 0.0
    %729 = vmatpush.msra.mxu0 0.0
    %730 = vmatpush.msra.mxu0 0.0
    %731 = vmatpush.msra.mxu0 0.0
    %732 = vmatpush.msra.mxu0 %v599
    %733 = vmatpush.msra.mxu0 %v598
    %734 = vmatpush.msra.mxu0 %v597
    %735 = vmatpush.msra.mxu0 %v596
    %736 = vmatmul.f32.gmra.mxu0 %v718
    %v737 = vpop.f32.mrf.mxu0
    %v738 = vadd.f32 %v715, %v737
    %739 = vdwg.mxu0
    %v740 = vsel %vm618, %v738, -inf
    %741 = vmax.xlane.f32.xlu0 %v740
    %v742 = vpop.xlane.xlu0 %741
    %v743 = vsub.f32 %v738, %v742
    %v744 = vmul.f32 %v743, 1.442695
    %v745 = vpow.pop %v744
    %v746 = vsel %vm618, %v745, 0.0
    %747 = vadd.xlane.f32.xlu0 %v746
    %v748 = vpop.xlane.xlu0 %747
    %v749 = vlog2.pop %v748
    %v750 = vmul.f32 %v749, 0.6931472
    %v751 = vsub.f32 %v743, %v750
    %752 = vst.msk [vmem:[#allocation9] sm:$0xff] %vm618, %v751
    %s753 = sadd.f32 %s222, %s435
    %s754 = sadd.f32 %s753, %s650
    %s755 = scalar_lea.smem [#allocation10], 0
    %756 = sst [smem:[%s755]] %s754
    %s757 = sadd.f32 %s285, %s498
    %s758 = sadd.f32 %s757, %s713
    %s759 = scalar_lea.smem [#allocation11], 0
    %760 = sst [smem:[%s759]] %s758
    // Predicated region
    $region90: #{tpu_custom_call.1} parent=1 // pred_check
      _
    $region91: #{tpu_custom_call.1} parent=1 // pred_check_branch
      %762 = sbr.rel (0) target = $region93
    $region92: #{tpu_custom_call.1} parent=1 // pred_region
      %764 = vsyncadd [#allocation4], 0
      %s766 = sshll.u32 [#allocation9], 4
      %s767 = int_to_ptr.vmem [resolvable:$true] %s766
      %s768 = sshll.u32 %s19, 4
      %s769 = int_to_ptr.hbm [resolvable:$true] %s768
      %771 = dma.vmem_to_hbm [thread:$0]  %s767, 128, %s769, [#allocation4]
    $region93: #{tpu_custom_call.1} parent=1 // pred_fallthru
      _
    // Predicated region
    $region94: #{tpu_custom_call.1} parent=1 // pred_check
      _
    $region95: #{tpu_custom_call.1} parent=1 // pred_check_branch
      %773 = sbr.rel (0) target = $region97
    $region96: #{tpu_custom_call.1} parent=1 // pred_region
      %775 = vsyncadd [#allocation5], 0
      %s777 = sshll.u32 %s20, 4
      %s778 = int_to_ptr.hbm [resolvable:$true] %s777
      %780 = dma.smem_to_hbm [#allocation10], 16, %s778, [#allocation5]
    $region97: #{tpu_custom_call.1} parent=1 // pred_fallthru
      _
    // Predicated region
    $region98: #{tpu_custom_call.1} parent=1 // pred_check
      _
    $region99: #{tpu_custom_call.1} parent=1 // pred_check_branch
      %782 = sbr.rel (0) target = $region101
    $region100: #{tpu_custom_call.1} parent=1 // pred_region
      %784 = vsyncadd [#allocation12], 0
      %s786 = sshll.u32 %s21, 4
      %s787 = int_to_ptr.hbm [resolvable:$true] %s786
      %789 = dma.smem_to_hbm [#allocation11], 16, %s787, [#allocation12]
    $region101: #{tpu_custom_call.1} parent=1 // pred_fallthru
      _
    // Predicated region
    $region102: #{tpu_custom_call.1} parent=1 // pred_check
      _
    $region103: #{tpu_custom_call.1} parent=1 // pred_check_branch
      %791 = sbr.rel (0) target = $region105
    $region104: #{tpu_custom_call.1} parent=1 // pred_region
      %793 = dma.done [#allocation4], 128
    $region105: #{tpu_custom_call.1} parent=1 // pred_fallthru
      _
    // Predicated region
    $region106: #{tpu_custom_call.1} parent=1 // pred_check
      _
    $region107: #{tpu_custom_call.1} parent=1 // pred_check_branch
      %795 = sbr.rel (0) target = $region109
    $region108: #{tpu_custom_call.1} parent=1 // pred_region
      %797 = dma.done [#allocation5], 16
    $region109: #{tpu_custom_call.1} parent=1 // pred_fallthru
      _
    // Predicated region
    $region110: #{tpu_custom_call.1} parent=1 // pred_check
      _
    $region111: #{tpu_custom_call.1} parent=1 // pred_check_branch
      %799 = sbr.rel (0) target = $region113
    $region112: #{tpu_custom_call.1} parent=1 // pred_region
      %801 = dma.done [#allocation12], 16
    $region113: #{tpu_custom_call.1} parent=1 // pred_fallthru
      _
    %802 = sfence
    %803 = vsyncpa [#allocation3], 1
    %804 = vsyncpa [#allocation7], 1
    %805 = vsyncpa [#allocation4], 1
    %806 = vsyncpa [#allocation5], 1
    %807 = vsyncpa [#allocation12], 1

</llo_original>
